<compile_context>
chip_gen: v6e
topology: v6e:2x2x1
jax: 0.10.0
libtpu: 0.0.40
codegen_flags: <defaults>
</compile_context>

<pallas_src>
import jax
import jax.numpy as jnp
from jax.experimental import pallas as pl
from jax.experimental.pallas import tpu as pltpu


def _round_up(x: int, m: int) -> int:
    return ((x + m - 1) // m) * m


def _dense_score_kernel(w_ref, x_ref, o_ref):
    """One grid step scores one row-tile.

    w_ref : (D, 1)   dense weight, pre-transposed, resident (constant index map)
    x_ref : (tm, D)  streamed row tile (ragged last block allowed)
    o_ref : (tm, 1)  f32 scores for this tile
    """
    # MXU-canonical (M,K)@(K,N): the big streamed tile is the LHS, untransposed.
    o_ref[...] = jnp.dot(
        x_ref[...], w_ref[...], preferred_element_type=jnp.float32
    )


def dense_project(x, weight, *, target_block_bytes=8 * 1024 * 1024,
                  vmem_cap_bytes=48 * 1024 * 1024):
    """Bias-free nn.Linear(D, 1) over rows: x (M, D) -> (M,) f32 scores.

    x      : (M, D) rows in their native dtype (streamed straight from HBM)
    weight : (1, D) f32 torch-layout nn.Linear weight
    """
    M, D = x.shape
    dtype = x.dtype
    itemsize = jnp.dtype(dtype).itemsize
    w_t = weight.reshape(1, D).astype(dtype).T          # (D, 1) MXU-native RHS

    # Row tile: ~target_block_bytes of x per VMEM buffer, computed from the
    # lane-padded row footprint (last dim pads to 128 lanes when D < 128).
    lane_d = _round_up(D, 128)
    x_row_vmem = lane_d * itemsize
    tm = (target_block_bytes // x_row_vmem) // 256 * 256
    tm = int(max(256, min(tm, 16384)))      # cap keeps the (tm,1) out block bounded
    if M > 8 * 256:
        # keep >= ~8 tiles so the "parallel" grid feeds both v7x TensorCores
        tm = min(tm, _round_up(pl.cdiv(M, 8), 256))
    if tm >= M:
        tm = M                              # one block; block == array dims is always legal
    grid = pl.cdiv(M, tm)                   # ragged last block: no padding copies

    # VMEM estimate with layout padding: double-buffered x block, lane-padded
    # (tm,1) out block, resident (D,1) weight.
    x_block = tm * lane_d * itemsize
    out_block = pl.cdiv(tm, 8) * 8 * 128 * 4
    w_block = pl.cdiv(D, 8) * 8 * 128 * itemsize
    vmem_need = 2 * x_block + 2 * out_block + 2 * w_block + (2 << 20)
    vmem_limit = int(min(max(2 * vmem_need, 16 << 20), vmem_cap_bytes))

    cost = pl.CostEstimate(
        flops=2 * M * D,
        transcendentals=0,
        bytes_accessed=M * D * itemsize + M * 4 + D * itemsize,
    )

    out = pl.pallas_call(
        _dense_score_kernel,
        out_shape=jax.ShapeDtypeStruct((M, 1), jnp.float32),
        grid_spec=pltpu.PrefetchScalarGridSpec(
            num_scalar_prefetch=0,
            grid=(grid,),
            in_specs=[
                pl.BlockSpec((D, 1), lambda i: (0, 0)),    # weight: resident, never re-DMA'd
                pl.BlockSpec((tm, D), lambda i: (i, 0)),   # streamed row tile
            ],
            out_specs=pl.BlockSpec((tm, 1), lambda i: (i, 0)),
        ),
        compiler_params=pltpu.CompilerParams(
            dimension_semantics=("parallel",),             # shards the 1-D grid on v7x megacore
            vmem_limit_bytes=vmem_limit,
        ),
        cost_estimate=cost,
    )(w_t, x)

    return out.reshape(M)


class RelevanceMatcher:
    """JAX/Pallas port of allenrank RelevanceMatcher base module."""

    def __init__(self, input_dim: int, key: jax.Array):
        # nn.Linear(input_dim, 1, bias=False): weight (1, input_dim),
        # kaiming-uniform init U(-1/sqrt(input_dim), 1/sqrt(input_dim)).
        bound = 1.0 / (input_dim ** 0.5)
        self.weight = jax.random.uniform(
            key, (1, input_dim), dtype=jnp.float32, minval=-bound, maxval=bound
        )
        self.input_dim = input_dim

    def forward(
        self,
        query_embeddings: jax.Array,        # (B, Sq, D)
        candidates_embeddings: jax.Array,   # (B, Sc, D)
        query_mask: jax.Array = None,       # (B, Sq) or None
        candidates_mask: jax.Array = None,  # (B, Sc) or None
    ):
        B, Sq, D = query_embeddings.shape
        _, Sc, _ = candidates_embeddings.shape

        # reshape is a view: the kernel streams the embeddings directly.
        q_scores = dense_project(
            query_embeddings.reshape(B * Sq, D), self.weight).reshape(B, Sq)
        c_scores = dense_project(
            candidates_embeddings.reshape(B * Sc, D), self.weight).reshape(B, Sc)

        # Mask applied on the tiny (B, S) score arrays (12 B/row of HBM traffic
        # vs >= D*itemsize B/row in the kernel); None costs nothing at all.
        if query_mask is not None:
            q_scores = q_scores * query_mask.astype(jnp.float32)
        if candidates_mask is not None:
            c_scores = c_scores * candidates_mask.astype(jnp.float32)
        return q_scores, c_scores


if __name__ == "__main__":
    key = jax.random.PRNGKey(0)
    k_w, k_q, k_c, k_q2, k_c2, k_m1, k_m2 = jax.random.split(key, 7)

    D = 32
    matcher = RelevanceMatcher(input_dim=D, key=k_w)
    hi = jax.lax.Precision.HIGHEST   # precision-robust reference

    # --- case 1: even shapes, explicit all-ones masks ---------------------
    B, Sq, Sc = 2, 8, 8
    q_emb = jax.random.normal(k_q, (B, Sq, D), dtype=jnp.float32)
    c_emb = jax.random.normal(k_c, (B, Sc, D), dtype=jnp.float32)
    q_mask = jnp.ones((B, Sq), jnp.float32)
    c_mask = jnp.ones((B, Sc), jnp.float32)

    q_scores, c_scores = matcher.forward(q_emb, c_emb, q_mask, c_mask)
    jax.block_until_ready((q_scores, c_scores))

    q_ref = jnp.einsum("bsd,od->bs", q_emb, matcher.weight, precision=hi) * q_mask
    c_ref = jnp.einsum("bsd,od->bs", c_emb, matcher.weight, precision=hi) * c_mask
    assert q_scores.shape == (B, Sq) and c_scores.shape == (B, Sc)
    # tolerance covers MXU vs XLA default matmul precision differences
    assert jnp.allclose(q_scores, q_ref, atol=2e-2, rtol=2e-2)
    assert jnp.allclose(c_scores, c_ref, atol=2e-2, rtol=2e-2)

    # --- case 2: ragged seq lengths + real (sparse) masks ------------------
    B2, Sq2, Sc2 = 2, 7, 5
    q_emb2 = jax.random.normal(k_q2, (B2, Sq2, D), dtype=jnp.float32)
    c_emb2 = jax.random.normal(k_c2, (B2, Sc2, D), dtype=jnp.float32)
    q_mask2 = (jax.random.uniform(k_m1, (B2, Sq2)) > 0.3).astype(jnp.float32)
    c_mask2 = (jax.random.uniform(k_m2, (B2, Sc2)) > 0.3).astype(jnp.float32)

    q_scores2, c_scores2 = matcher.forward(q_emb2, c_emb2, q_mask2, c_mask2)
    jax.block_until_ready((q_scores2, c_scores2))

    q_ref2 = jnp.einsum("bsd,od->bs", q_emb2, matcher.weight, precision=hi) * q_mask2
    c_ref2 = jnp.einsum("bsd,od->bs", c_emb2, matcher.weight, precision=hi) * c_mask2
    assert jnp.allclose(q_scores2, q_ref2, atol=2e-2, rtol=2e-2)
    assert jnp.allclose(c_scores2, c_ref2, atol=2e-2, rtol=2e-2)

    # --- case 3: masks omitted (None) — no mask materialized or streamed ---
    q_scores3, c_scores3 = matcher.forward(q_emb, c_emb)
    jax.block_until_ready((q_scores3, c_scores3))
    assert jnp.allclose(
        q_scores3, jnp.einsum("bsd,od->bs", q_emb, matcher.weight, precision=hi),
        atol=2e-2, rtol=2e-2)

    print("KERNEL_OK")
</pallas_src>

<mosaic_0001>
module attributes {stable_mosaic.version = 11 : i64} {
  func.func @_dense_score_kernel(%arg0: i32, %arg1: memref<32x1xf32, #tpu.memory_space<vmem>>, %arg2: memref<16x32xf32, #tpu.memory_space<vmem>>, %arg3: memref<16x1xf32, #tpu.memory_space<vmem>>) attributes {dimension_semantics = [#tpu.dimension_semantics<parallel>], iteration_bounds = array<i64: 1>, scalar_prefetch = 0 : i64, scratch_operands = 0 : i64, tpu.core_type = #tpu.core_type<tc>, window_params = [{pipeline_mode = #tpu.pipeline_mode<synchronous>, transform_indices = @transform_0, window_bounds = array<i64: 32, 1>}, {transform_indices = @transform_1, window_bounds = array<i64: 16, 32>}, {transform_indices = @transform_2, window_bounds = array<i64: 16, 1>}]} {
    %c0 = arith.constant 0 : index
    %c0_0 = arith.constant 0 : index
    %0 = vector.load %arg2[%c0, %c0_0] : memref<16x32xf32, #tpu.memory_space<vmem>>, vector<16x32xf32>
    %c0_1 = arith.constant 0 : index
    %c0_2 = arith.constant 0 : index
    %1 = vector.load %arg1[%c0_1, %c0_2] : memref<32x1xf32, #tpu.memory_space<vmem>>, vector<32x1xf32>
    %cst = arith.constant dense<0.000000e+00> : vector<16x1xf32>
    %2 = tpu.matmul %0, %1, %cst {dimension_numbers = #tpu.dot_dimension_numbers<[1], [0], [0], [1], [0, 0, 1, 1], [], []>} : vector<16x32xf32>, vector<32x1xf32>, vector<16x1xf32> -> vector<16x1xf32>
    %c0_3 = arith.constant 0 : index
    %c0_4 = arith.constant 0 : index
    %3 = vector.load %arg3[%c0_3, %c0_4] : memref<16x1xf32, #tpu.memory_space<vmem>>, vector<16x1xf32>
    tpu.vector_store %arg3[%c0_3, %c0_4], %2 {strides = array<i32>} : memref<16x1xf32, #tpu.memory_space<vmem>>, vector<16x1xf32>,
    return
  }
  func.func @transform_0(%arg0: i32) -> (i32, i32) {
    %c0_i32 = arith.constant 0 : i32
    %c0_i32_0 = arith.constant 0 : i32
    %c0_i32_1 = arith.constant 0 : i32
    return %c0_i32, %c0_i32_0 : i32, i32
  }
  func.func @transform_1(%arg0: i32) -> (i32, i32) {
    %c0_i32 = arith.constant 0 : i32
    %c0_i32_0 = arith.constant 0 : i32
    return %arg0, %c0_i32 : i32, i32
  }
  func.func @transform_2(%arg0: i32) -> (i32, i32) {
    %c0_i32 = arith.constant 0 : i32
    %c0_i32_0 = arith.constant 0 : i32
    return %arg0, %c0_i32 : i32, i32
  }
}

</mosaic_0001>

<llo_original>
// kernel: tpu_custom_call.1
$region0: #{tpu_custom_call.1}
  #allocation0 [shape = 'u32[]', space=smem, size = 0x4, offset = 0x4, fixed_abs, tag = 'smem constant byte address 0x4 - core index']
  #allocation1 [shape = 'u32[144,128]{1,0:T(1,128)}', space=vmem, size = 0x12000, scoped, tag = 'internal scratch']
  %s0 = inlined_call_operand.vmem [shape: f32[32,1], index: 0, kind: input, shape index: {}]
  %s1 = inlined_call_operand.vmem [shape: f32[16,32], index: 1, kind: input, shape index: {}]
  %s2 = inlined_call_operand.vmem [shape: f32[16,1], index: 2, kind: output, shape index: {}]
  %s3 = sld [smem:[#allocation0]]
  $region18: #{tpu_custom_call.1} parent=0
    _
  %s5 = ssub.s32 1, %s3
  %s6 = scalar_select 0, %s5, %s3
  // Predicated region
  $region2: #{tpu_custom_call.1} parent=0 // pred_check
    _
  $region3: #{tpu_custom_call.1} parent=0 // pred_check_branch
    %8 = sbr.rel (0) target = $region5
  $region4: #{tpu_custom_call.1} parent=0 // pred_region
    _
  $region5: #{tpu_custom_call.1} parent=0 // pred_fallthru
    _
  // Predicated region
  $region6: #{tpu_custom_call.1} parent=0 // pred_check
    _
  $region7: #{tpu_custom_call.1} parent=0 // pred_check_branch
    %10 = sbr.rel (0) target = $region9
  $region8: #{tpu_custom_call.1} parent=0 // pred_region
    _
  $region9: #{tpu_custom_call.1} parent=0 // pred_fallthru
    _
  %v11 = vld [vmem:[%s1] sm:$0xff]
  %v12 = vld [vmem:[%s1 + $0x8] sm:$0xff]
  %v13 = vld [vmem:[%s0] sm:$0xff]
  %v14 = vld [vmem:[%s0 + $0x8] sm:$0xff]
  %v15 = vld [vmem:[%s0 + $0x10] sm:$0xff]
  %v16 = vld [vmem:[%s0 + $0x18] sm:$0xff]
  %vm17 = vcmask 261120
  %v19 = vsel %vm17, %v11, 0
  %v22 = vsel %vm17, %v12, 0
  %24 = vmatprep.subr.mxu0 0.0
  %25 = vmatpush1.msra.mxu0 0.0
  %26 = vmatprep.subr.mxu0 0.0
  %27 = vmatpush1.msra.mxu0 0.0
  %28 = vmatprep.subr.mxu0 0.0
  %29 = vmatpush1.msra.mxu0 0.0
  %30 = vmatprep.subr.mxu0 0.0
  %31 = vmatpush1.msra.mxu0 0.0
  %32 = vmatprep.subr.mxu0 0.0
  %33 = vmatpush1.msra.mxu0 0.0
  %34 = vmatprep.subr.mxu0 0.0
  %35 = vmatpush1.msra.mxu0 0.0
  %36 = vmatprep.subr.mxu0 0.0
  %37 = vmatpush1.msra.mxu0 0.0
  %38 = vmatprep.subr.mxu0 0.0
  %39 = vmatpush1.msra.mxu0 0.0
  %40 = vmatprep.subr.mxu0 0.0
  %41 = vmatpush1.msra.mxu0 0.0
  %42 = vmatprep.subr.mxu0 0.0
  %43 = vmatpush1.msra.mxu0 0.0
  %44 = vmatprep.subr.mxu0 0.0
  %45 = vmatpush1.msra.mxu0 0.0
  %46 = vmatprep.subr.mxu0 0.0
  %47 = vmatpush1.msra.mxu0 0.0
  %48 = vmatprep.subr.mxu0 0.0
  %49 = vmatpush1.msra.mxu0 %v16
  %50 = vmatprep.subr.mxu0 0.0
  %51 = vmatpush1.msra.mxu0 %v15
  %52 = vmatprep.subr.mxu0 0.0
  %53 = vmatpush1.msra.mxu0 %v14
  %54 = vmatprep.subr.mxu0 0.0
  %55 = vmatpush1.msra.mxu0 %v13
  %56 = vmatprep.subr.mxu0 0.0
  %57 = vmatpush2.msra.mxu0 0.0
  %58 = vmatprep.subr.mxu0 0.0
  %59 = vmatpush2.msra.mxu0 0.0
  %60 = vmatprep.subr.mxu0 0.0
  %61 = vmatpush2.msra.mxu0 0.0
  %62 = vmatprep.subr.mxu0 0.0
  %63 = vmatpush2.msra.mxu0 0.0
  %64 = vmatprep.subr.mxu0 0.0
  %65 = vmatpush2.msra.mxu0 0.0
  %66 = vmatprep.subr.mxu0 0.0
  %67 = vmatpush2.msra.mxu0 0.0
  %68 = vmatprep.subr.mxu0 0.0
  %69 = vmatpush2.msra.mxu0 0.0
  %70 = vmatprep.subr.mxu0 0.0
  %71 = vmatpush2.msra.mxu0 0.0
  %72 = vmatprep.subr.mxu0 0.0
  %73 = vmatpush2.msra.mxu0 0.0
  %74 = vmatprep.subr.mxu0 0.0
  %75 = vmatpush2.msra.mxu0 0.0
  %76 = vmatprep.subr.mxu0 0.0
  %77 = vmatpush2.msra.mxu0 0.0
  %78 = vmatprep.subr.mxu0 0.0
  %79 = vmatpush2.msra.mxu0 0.0
  %80 = vmatprep.subr.mxu0 0.0
  %81 = vmatpush2.msra.mxu0 0.0
  %82 = vmatprep.subr.mxu0 0.0
  %83 = vmatpush2.msra.mxu0 0.0
  %84 = vmatprep.subr.mxu0 0.0
  %85 = vmatpush2.msra.mxu0 0.0
  %86 = vmatprep.subr.mxu0 0.0
  %87 = vmatpush2.msra.mxu0 0.0
  %88 = vmatprep.mubr.f32.mxu0 0.0
  %89 = vmatmul.mubr.f32.gmra.mxu0 %v19
  %v90 = vpop.f32.mrf.mxu0
  %v91 = vadd.f32 0.0, %v90
  %v92 = vpop.f32.mrf.mxu0
  %93 = vmatprep.mubr.f32.mxu0 0.0
  %94 = vmatmul.mubr.f32.gmra.mxu0 %v22
  %v95 = vpop.f32.mrf.mxu0
  %v96 = vadd.f32 0.0, %v95
  %v97 = vpop.f32.mrf.mxu0
  %98 = vdwg.mxu0
  %vm99 = vcmask 7168
  %100 = vst.msk [vmem:[%s2] sm:$0xff] %vm99, %v91
  %101 = vst.msk [vmem:[%s2 + $0x8] sm:$0xff] %vm99, %v96
  // Predicated region
  $region10: #{tpu_custom_call.1} parent=0 // pred_check
    _
  $region11: #{tpu_custom_call.1} parent=0 // pred_check_branch
    %103 = sbr.rel (0) target = $region13
  $region12: #{tpu_custom_call.1} parent=0 // pred_region
    _
  $region13: #{tpu_custom_call.1} parent=0 // pred_fallthru
    _
  // Predicated region
  $region14: #{tpu_custom_call.1} parent=0 // pred_check
    _
  $region15: #{tpu_custom_call.1} parent=0 // pred_check_branch
    %105 = sbr.rel (0) target = $region17
  $region16: #{tpu_custom_call.1} parent=0 // pred_region
    _
  $region17: #{tpu_custom_call.1} parent=0 // pred_fallthru
    _

</llo_original>
